<compile_context>
chip_gen: v7x
topology: tpu7x:2x2x1
jax: 0.10.0
libtpu: 0.0.40
codegen_flags: <defaults>
</compile_context>

<pallas_src>
import functools

import jax
import jax.numpy as jnp
import numpy as np
from jax.experimental import pallas as pl
from jax.experimental.pallas import tpu as pltpu


def _round_up(x: int, m: int) -> int:
    return ((x + m - 1) // m) * m


def _head_matmul_kernel(x_ref, w_ref, b_ref, o_ref, acc_ref):
    """One output tile, accumulated over the K grid axis (grid axis 2).

    x_ref: (tm, tk)   w_ref: (tk, tn)   b_ref: (1, tn)
    o_ref: (tm, tn)   acc_ref: (tm, tn) f32 scratch
    """
    k = pl.program_id(2)

    @pl.when(k == 0)
    def _init():
        acc_ref[...] = jnp.zeros_like(acc_ref)

    acc_ref[...] += jnp.dot(
        x_ref[...], w_ref[...], preferred_element_type=jnp.float32
    )

    @pl.when(k == pl.num_programs(2) - 1)
    def _finalize():
        y = acc_ref[...] + b_ref[...].astype(jnp.float32)
        o_ref[...] = y.astype(o_ref.dtype)


@functools.partial(jax.jit, static_argnames=("individual", "compute_dtype"))
def prediction_head_forward(x, weight, bias, *, individual: bool,
                            compute_dtype=None):
    """
    x:      [bs, nvars, d_model, num_patch]
    weight: [nvars, head_dim, forecast_len] if individual
            else [1, head_dim, forecast_len]
            (already transposed vs. nn.Linear's [forecast_len, head_dim])
    bias:   [nvars, forecast_len] if individual else [1, forecast_len]
    compute_dtype: optional matmul input dtype (e.g. jnp.bfloat16); the
            accumulation is f32 and the output keeps x's original dtype.
    returns [bs, forecast_len, nvars]
    """
    bs, nvars, d_model, num_patch = x.shape
    head_dim = d_model * num_patch
    forecast_len = weight.shape[-1]
    out_dtype = x.dtype

    if compute_dtype is not None:
        x = x.astype(compute_dtype)
        weight = weight.astype(compute_dtype)

    # nn.Flatten(start_dim=-2): row-major merge of (d_model, num_patch).
    z = x.reshape(bs, nvars, head_dim)

    # ---- tile sizes: lane-dense N, bounded K tile, sublane-aligned M ----
    sublane = {4: 8, 2: 16, 1: 32}.get(jnp.dtype(z.dtype).itemsize, 8)
    tk = min(2048, _round_up(head_dim, 128))
    tn = min(256, _round_up(forecast_len, 128))
    k_pad = _round_up(head_dim, tk)
    n_pad = _round_up(forecast_len, tn)

    compiler_params = pltpu.CompilerParams(
        dimension_semantics=("parallel", "parallel", "arbitrary"),
        vmem_limit_bytes=32 * 1024 * 1024,
    )

    if not individual:
        # ---- shared weight: one big (bs*nvars, head_dim) @ (head_dim, F) ----
        m = bs * nvars
        tm = min(256, _round_up(m, sublane))
        m_pad = _round_up(m, tm)

        zz = z.reshape(m, head_dim)                       # contiguous, free
        zz = jnp.pad(zz, ((0, m_pad - m), (0, k_pad - head_dim)))
        w = jnp.pad(weight[0],
                    ((0, k_pad - head_dim), (0, n_pad - forecast_len)))
        b = jnp.pad(bias[0], (0, n_pad - forecast_len)).reshape(1, n_pad)

        grid = (m_pad // tm, n_pad // tn, k_pad // tk)
        cost = pl.CostEstimate(
            flops=2 * m * head_dim * forecast_len,
            transcendentals=0,
            bytes_accessed=int(zz.size * zz.dtype.itemsize
                               + w.size * w.dtype.itemsize
                               + b.size * b.dtype.itemsize
                               + m_pad * n_pad * jnp.dtype(out_dtype).itemsize),
        )

        out = pl.pallas_call(
            _head_matmul_kernel,
            out_shape=jax.ShapeDtypeStruct((m_pad, n_pad), out_dtype),
            grid_spec=pltpu.PrefetchScalarGridSpec(
                num_scalar_prefetch=0,
                grid=grid,
                in_specs=[
                    pl.BlockSpec((tm, tk), lambda i, j, k: (i, k)),
                    pl.BlockSpec((tk, tn), lambda i, j, k: (k, j)),
                    pl.BlockSpec((1, tn), lambda i, j, k: (0, j)),
                ],
                out_specs=pl.BlockSpec((tm, tn), lambda i, j, k: (i, j)),
                scratch_shapes=[pltpu.VMEM((tm, tn), jnp.float32)],
            ),
            compiler_params=compiler_params,
            cost_estimate=cost,
        )(zz, w, b)

        y = out[:m, :forecast_len].reshape(bs, nvars, forecast_len)
        return jnp.transpose(y, (0, 2, 1))                # [bs, F, nvars]

    # ---- individual weights: grid over (nvars, N tiles, K tiles) ----
    zz = jnp.transpose(z, (1, 0, 2))                      # [nvars, bs, head_dim]
    zz = jnp.pad(zz, ((0, 0), (0, 0), (0, k_pad - head_dim)))
    w = jnp.pad(weight,
                ((0, 0), (0, k_pad - head_dim), (0, n_pad - forecast_len)))
    b = jnp.pad(bias, ((0, 0), (0, n_pad - forecast_len)))[:, None, :]

    grid = (nvars, n_pad // tn, k_pad // tk)
    cost = pl.CostEstimate(
        flops=2 * bs * nvars * head_dim * forecast_len,
        transcendentals=0,
        bytes_accessed=int(zz.size * zz.dtype.itemsize
                           + w.size * w.dtype.itemsize
                           + b.size * b.dtype.itemsize
                           + nvars * bs * n_pad * jnp.dtype(out_dtype).itemsize),
    )

    out = pl.pallas_call(
        _head_matmul_kernel,
        out_shape=jax.ShapeDtypeStruct((nvars, bs, n_pad), out_dtype),
        grid_spec=pltpu.PrefetchScalarGridSpec(
            num_scalar_prefetch=0,
            grid=grid,
            in_specs=[
                pl.BlockSpec((None, bs, tk), lambda v, j, k: (v, 0, k)),
                pl.BlockSpec((None, tk, tn), lambda v, j, k: (v, k, j)),
                pl.BlockSpec((None, 1, tn), lambda v, j, k: (v, 0, j)),
            ],
            out_specs=pl.BlockSpec((None, bs, tn), lambda v, j, k: (v, 0, j)),
            scratch_shapes=[pltpu.VMEM((bs, tn), jnp.float32)],
        ),
        compiler_params=compiler_params,
        cost_estimate=cost,
    )(zz, w, b)

    y = out[:, :, :forecast_len]                          # [nvars, bs, F]
    return jnp.transpose(y, (1, 2, 0))                    # [bs, F, nvars]


def _reference_forward(x, weight, bias, individual):
    bs, nvars, d_model, num_patch = x.shape
    head_dim = d_model * num_patch
    z = x.reshape(bs, nvars, head_dim)
    if individual:
        y = jnp.einsum("bvh,vhf->bvf", z, weight) + bias[None, :, :]
    else:
        y = jnp.einsum("bvh,hf->bvf", z, weight[0]) + bias[0][None, None, :]
    return jnp.transpose(y, (0, 2, 1))                    # [bs, F, nvars]


if __name__ == "__main__":
    # Small shapes consistent with the module.
    bs, nvars, d_model, num_patch = 2, 4, 16, 8
    head_dim = d_model * num_patch            # 128
    forecast_len = 24

    key = jax.random.PRNGKey(0)
    kx, kw, kb = jax.random.split(key, 3)
    x = jax.random.normal(kx, (bs, nvars, d_model, num_patch), dtype=jnp.float32)

    ok = True
    for individual in (False, True):
        n_w = nvars if individual else 1
        weight = 0.02 * jax.random.normal(
            kw, (n_w, head_dim, forecast_len), dtype=jnp.float32
        )
        bias = 0.01 * jax.random.normal(kb, (n_w, forecast_len), dtype=jnp.float32)

        ref = _reference_forward(x, weight, bias, individual)

        # f32 compute path — tight tolerance.
        out = prediction_head_forward(x, weight, bias, individual=individual)
        out = jax.block_until_ready(out)
        if out.shape != (bs, forecast_len, nvars):
            ok = False
        if not np.allclose(np.asarray(out), np.asarray(ref), rtol=1e-5, atol=1e-5):
            ok = False

        # bf16 compute path (weight/activation cast, f32 accumulate) — loose tol.
        out_bf16 = prediction_head_forward(
            x, weight, bias, individual=individual, compute_dtype=jnp.bfloat16
        )
        out_bf16 = jax.block_until_ready(out_bf16)
        if out_bf16.shape != (bs, forecast_len, nvars):
            ok = False
        if not np.allclose(np.asarray(out_bf16), np.asarray(ref),
                           rtol=3e-2, atol=3e-2):
            ok = False

    if ok:
        print("KERNEL_OK")
</pallas_src>

<mosaic_0001>
module attributes {stable_mosaic.version = 11 : i64} {
  func.func @_head_matmul_kernel(%arg0: i32, %arg1: i32, %arg2: i32, %arg3: memref<8x128xf32, #tpu.memory_space<vmem>>, %arg4: memref<128x128xf32, #tpu.memory_space<vmem>>, %arg5: memref<1x128xf32, #tpu.memory_space<vmem>>, %arg6: memref<8x128xf32, #tpu.memory_space<vmem>>, %arg7: memref<8x128xf32, #tpu.memory_space<vmem>>) attributes {dimension_semantics = [#tpu.dimension_semantics<parallel>, #tpu.dimension_semantics<parallel>, #tpu.dimension_semantics<arbitrary>], iteration_bounds = array<i64: 1, 1, 1>, scalar_prefetch = 0 : i64, scratch_operands = 1 : i64, tpu.core_type = #tpu.core_type<tc>, window_params = [{transform_indices = @transform_0, window_bounds = array<i64: 8, 128>}, {transform_indices = @transform_1, window_bounds = array<i64: 128, 128>}, {transform_indices = @transform_2, window_bounds = array<i64: 1, 128>}, {transform_indices = @transform_3, window_bounds = array<i64: 8, 128>}]} {
    %c0_i32 = arith.constant 0 : i32
    %0 = arith.cmpi eq, %arg2, %c0_i32 : i32
    %1 = arith.extui %0 : i1 to i32
    %c0_i32_0 = arith.constant 0 : i32
    %2 = arith.cmpi ne, %1, %c0_i32_0 : i32
    scf.if %2 {
      %cst_10 = arith.constant 0.000000e+00 : f32
      %12 = vector.broadcast %cst_10 : f32 to vector<8x128xf32>
      %c0_11 = arith.constant 0 : index
      %c0_12 = arith.constant 0 : index
      %13 = vector.load %arg7[%c0_11, %c0_12] : memref<8x128xf32, #tpu.memory_space<vmem>>, vector<8x128xf32>
      tpu.vector_store %arg7[%c0_11, %c0_12], %12 {strides = array<i32>} : memref<8x128xf32, #tpu.memory_space<vmem>>, vector<8x128xf32>,
    } else {
    }
    %c0 = arith.constant 0 : index
    %c0_1 = arith.constant 0 : index
    %3 = vector.load %arg7[%c0, %c0_1] : memref<8x128xf32, #tpu.memory_space<vmem>>, vector<8x128xf32>
    %c0_2 = arith.constant 0 : index
    %c0_3 = arith.constant 0 : index
    %4 = vector.load %arg3[%c0_2, %c0_3] : memref<8x128xf32, #tpu.memory_space<vmem>>, vector<8x128xf32>
    %c0_4 = arith.constant 0 : index
    %c0_5 = arith.constant 0 : index
    %5 = vector.load %arg4[%c0_4, %c0_5] : memref<128x128xf32, #tpu.memory_space<vmem>>, vector<128x128xf32>
    %cst = arith.constant dense<0.000000e+00> : vector<8x128xf32>
    %6 = tpu.matmul %4, %5, %cst {dimension_numbers = #tpu.dot_dimension_numbers<[1], [0], [0], [1], [0, 0, 1, 1], [], []>} : vector<8x128xf32>, vector<128x128xf32>, vector<8x128xf32> -> vector<8x128xf32>
    %7 = arith.addf %3, %6 : vector<8x128xf32>
    %c0_6 = arith.constant 0 : index
    %c0_7 = arith.constant 0 : index
    %8 = vector.load %arg7[%c0_6, %c0_7] : memref<8x128xf32, #tpu.memory_space<vmem>>, vector<8x128xf32>
    tpu.vector_store %arg7[%c0_6, %c0_7], %7 {strides = array<i32>} : memref<8x128xf32, #tpu.memory_space<vmem>>, vector<8x128xf32>,
    %c0_i32_8 = arith.constant 0 : i32
    %9 = arith.cmpi eq, %arg2, %c0_i32_8 : i32
    %10 = arith.extui %9 : i1 to i32
    %c0_i32_9 = arith.constant 0 : i32
    %11 = arith.cmpi ne, %10, %c0_i32_9 : i32
    scf.if %11 {
      %c0_10 = arith.constant 0 : index
      %c0_11 = arith.constant 0 : index
      %12 = vector.load %arg7[%c0_10, %c0_11] : memref<8x128xf32, #tpu.memory_space<vmem>>, vector<8x128xf32>
      %c0_12 = arith.constant 0 : index
      %c0_13 = arith.constant 0 : index
      %13 = vector.load %arg5[%c0_12, %c0_13] : memref<1x128xf32, #tpu.memory_space<vmem>>, vector<1x128xf32>
      %14 = vector.broadcast %13 : vector<1x128xf32> to vector<8x128xf32>
      %15 = arith.addf %12, %14 : vector<8x128xf32>
      %c0_14 = arith.constant 0 : index
      %c0_15 = arith.constant 0 : index
      %16 = vector.load %arg6[%c0_14, %c0_15] : memref<8x128xf32, #tpu.memory_space<vmem>>, vector<8x128xf32>
      tpu.vector_store %arg6[%c0_14, %c0_15], %15 {strides = array<i32>} : memref<8x128xf32, #tpu.memory_space<vmem>>, vector<8x128xf32>,
    } else {
    }
    return
  }
  func.func @transform_0(%arg0: i32, %arg1: i32, %arg2: i32) -> (i32, i32) {
    %c0_i32 = arith.constant 0 : i32
    return %arg0, %arg2 : i32, i32
  }
  func.func @transform_1(%arg0: i32, %arg1: i32, %arg2: i32) -> (i32, i32) {
    %c0_i32 = arith.constant 0 : i32
    return %arg2, %arg1 : i32, i32
  }
  func.func @transform_2(%arg0: i32, %arg1: i32, %arg2: i32) -> (i32, i32) {
    %c0_i32 = arith.constant 0 : i32
    %c0_i32_0 = arith.constant 0 : i32
    return %c0_i32, %arg1 : i32, i32
  }
  func.func @transform_3(%arg0: i32, %arg1: i32, %arg2: i32) -> (i32, i32) {
    %c0_i32 = arith.constant 0 : i32
    return %arg0, %arg1 : i32, i32
  }
}

</mosaic_0001>

<llo_original>
// kernel: prediction_head_forward.1
$region0: #{prediction_head_forward.1}
  #allocation0 [shape = 'u32[]', space=smem, size = 0x4, offset = 0x4, fixed_abs, tag = 'smem constant byte address 0x4 - core index']
  #allocation1 [shape = 'u32[144,128]{1,0:T(1,128)}', space=vmem, size = 0x12000, scoped, tag = 'internal scratch']
  #allocation2 [shape = 'f32[8,128]{1,0:T(8,128)}', space=vmem, size = 0x1000, scoped, tag = 'scratch operand']
  %s0 = inlined_call_operand.vmem [shape: f32[8,128], index: 0, kind: input, shape index: {}]
  %s1 = inlined_call_operand.vmem [shape: f32[128,128], index: 1, kind: input, shape index: {}]
  %s2 = inlined_call_operand.vmem [shape: f32[1,128], index: 2, kind: input, shape index: {}]
  %s3 = inlined_call_operand.hbm [shape: f32[8,128], index: 3, kind: output, shape index: {}]
  %s4 = sld [smem:[#allocation0]]
  $region30: #{prediction_head_forward.1} parent=0
    _
  %s6 = ssub.s32 1, %s4
  %s7 = scalar_select 0, %s6, %s4
  $region1: #{prediction_head_forward.1} parent=0
    #allocation3 [shape = 'u8[4096]{0}', space=vmem, size = 0x1000, scoped, tag = 'output window, operand 0, single buffered']
    #allocation4 [shape = 's32[1]{0}', space=sflag, size = 0x4, scoped, tag = 'scoped memory for prediction_head_forward.1']
    %8 = vsyncpa [#allocation4], 0
    // Predicated region
    $region2: #{prediction_head_forward.1} parent=1 // pred_check
      _
    $region3: #{prediction_head_forward.1} parent=1 // pred_check_branch
      %10 = sbr.rel (0) target = $region5
    $region4: #{prediction_head_forward.1} parent=1 // pred_region
      _
    $region5: #{prediction_head_forward.1} parent=1 // pred_fallthru
      _
    // Predicated region
    $region6: #{prediction_head_forward.1} parent=1 // pred_check
      _
    $region7: #{prediction_head_forward.1} parent=1 // pred_check_branch
      %12 = sbr.rel (0) target = $region9
    $region8: #{prediction_head_forward.1} parent=1 // pred_region
      _
    $region9: #{prediction_head_forward.1} parent=1 // pred_fallthru
      _
    // Predicated region
    $region10: #{prediction_head_forward.1} parent=1 // pred_check
      _
    $region11: #{prediction_head_forward.1} parent=1 // pred_check_branch
      %14 = sbr.rel (0) target = $region13
    $region12: #{prediction_head_forward.1} parent=1 // pred_region
      _
    $region13: #{prediction_head_forward.1} parent=1 // pred_fallthru
      _
    %p15 = scmp.eq.s32.totalorder 0, 0
    // Predicated region
    $region14: #{prediction_head_forward.1} parent=1 // pred_check
      %p16 = pneg %p15
    $region15: #{prediction_head_forward.1} parent=1 // pred_check_branch
      %18 = sbr.rel (%p16) target = $region17
    $region16: #{prediction_head_forward.1} parent=1 // pred_region
      %19 = vst [vmem:[#allocation2] sm:$0xff] 0.0
    $region17: #{prediction_head_forward.1} parent=1 // pred_fallthru
      _
    %v20 = vld [vmem:[#allocation2] sm:$0xff]
    %v21 = vld [vmem:[%s0] sm:$0xff]
    %v22 = vld [vmem:[%s1] sm:$0xff]
    %v23 = vld [vmem:[%s1 + $0x8] sm:$0xff]
    %v24 = vld [vmem:[%s1 + $0x10] sm:$0xff]
    %v25 = vld [vmem:[%s1 + $0x18] sm:$0xff]
    %v26 = vld [vmem:[%s1 + $0x20] sm:$0xff]
    %v27 = vld [vmem:[%s1 + $0x28] sm:$0xff]
    %v28 = vld [vmem:[%s1 + $0x30] sm:$0xff]
    %v29 = vld [vmem:[%s1 + $0x38] sm:$0xff]
    %v30 = vld [vmem:[%s1 + $0x40] sm:$0xff]
    %v31 = vld [vmem:[%s1 + $0x48] sm:$0xff]
    %v32 = vld [vmem:[%s1 + $0x50] sm:$0xff]
    %v33 = vld [vmem:[%s1 + $0x58] sm:$0xff]
    %v34 = vld [vmem:[%s1 + $0x60] sm:$0xff]
    %v35 = vld [vmem:[%s1 + $0x68] sm:$0xff]
    %v36 = vld [vmem:[%s1 + $0x70] sm:$0xff]
    %v37 = vld [vmem:[%s1 + $0x78] sm:$0xff]
    %38 = vmatprep.subr.mxu0 0.0
    %39 = vmatpush1.msra.mxu0 %v22
    %40 = vmatprep.subr.mxu0 0.0
    %41 = vmatpush1.msra.mxu0 %v23
    %42 = vmatprep.subr.mxu0 0.0
    %43 = vmatpush1.msra.mxu0 %v24
    %44 = vmatprep.subr.mxu0 0.0
    %45 = vmatpush1.msra.mxu0 %v25
    %46 = vmatprep.subr.mxu0 0.0
    %47 = vmatpush1.msra.mxu0 %v26
    %48 = vmatprep.subr.mxu0 0.0
    %49 = vmatpush1.msra.mxu0 %v27
    %50 = vmatprep.subr.mxu0 0.0
    %51 = vmatpush1.msra.mxu0 %v28
    %52 = vmatprep.subr.mxu0 0.0
    %53 = vmatpush1.msra.mxu0 %v29
    %54 = vmatprep.subr.mxu0 0.0
    %55 = vmatpush1.msra.mxu0 %v30
    %56 = vmatprep.subr.mxu0 0.0
    %57 = vmatpush1.msra.mxu0 %v31
    %58 = vmatprep.subr.mxu0 0.0
    %59 = vmatpush1.msra.mxu0 %v32
    %60 = vmatprep.subr.mxu0 0.0
    %61 = vmatpush1.msra.mxu0 %v33
    %62 = vmatprep.subr.mxu0 0.0
    %63 = vmatpush1.msra.mxu0 %v34
    %64 = vmatprep.subr.mxu0 0.0
    %65 = vmatpush1.msra.mxu0 %v35
    %66 = vmatprep.subr.mxu0 0.0
    %67 = vmatpush1.msra.mxu0 %v36
    %68 = vmatprep.subr.mxu0 0.0
    %69 = vmatpush1.msra.mxu0 %v37
    %70 = vmatprep.subr.mxu0 0.0
    %71 = vmatpush1.msra.mxu0 0.0
    %72 = vmatprep.subr.mxu0 0.0
    %73 = vmatpush1.msra.mxu0 0.0
    %74 = vmatprep.subr.mxu0 0.0
    %75 = vmatpush1.msra.mxu0 0.0
    %76 = vmatprep.subr.mxu0 0.0
    %77 = vmatpush1.msra.mxu0 0.0
    %78 = vmatprep.subr.mxu0 0.0
    %79 = vmatpush1.msra.mxu0 0.0
    %80 = vmatprep.subr.mxu0 0.0
    %81 = vmatpush1.msra.mxu0 0.0
    %82 = vmatprep.subr.mxu0 0.0
    %83 = vmatpush1.msra.mxu0 0.0
    %84 = vmatprep.subr.mxu0 0.0
    %85 = vmatpush1.msra.mxu0 0.0
    %86 = vmatprep.subr.mxu0 0.0
    %87 = vmatpush1.msra.mxu0 0.0
    %88 = vmatprep.subr.mxu0 0.0
    %89 = vmatpush1.msra.mxu0 0.0
    %90 = vmatprep.subr.mxu0 0.0
    %91 = vmatpush1.msra.mxu0 0.0
    %92 = vmatprep.subr.mxu0 0.0
    %93 = vmatpush1.msra.mxu0 0.0
    %94 = vmatprep.subr.mxu0 0.0
    %95 = vmatpush1.msra.mxu0 0.0
    %96 = vmatprep.subr.mxu0 0.0
    %97 = vmatpush1.msra.mxu0 0.0
    %98 = vmatprep.subr.mxu0 0.0
    %99 = vmatpush1.msra.mxu0 0.0
    %100 = vmatprep.subr.mxu0 0.0
    %101 = vmatpush1.msra.mxu0 0.0
    %102 = vmatprep.mubr.f32.mxu0 0.0
    %103 = vmatmul.mubr.f32.gmra.mrb[0].mxu0 %v21
    %v104 = vpop.f32.mrb[0].mxu0
    %v105 = vadd.f32 0.0, %v104
    %v106 = vpop.f32.mrb[0].mxu0
    %107 = vdwg.mxu0
    %v108 = vadd.f32 %v20, %v105
    %109 = vst [vmem:[#allocation2] sm:$0xff] %v108
    // Predicated region
    $region18: #{prediction_head_forward.1} parent=1 // pred_check
      %p110 = pneg %p15
    $region19: #{prediction_head_forward.1} parent=1 // pred_check_branch
      %112 = sbr.rel (%p110) target = $region21
    $region20: #{prediction_head_forward.1} parent=1 // pred_region
      %v113 = vld [vmem:[#allocation2] sm:$0xff]
      %v114 = vld [vmem:[%s2] sm:$0x1]
      %v116 = vlaneseq
      %v117 = vshrl.u32 %v116, 7
      %v118 = vsub.s32 0, %v117
      %v119 = vrot.slane %v114, %v118
      %v121 = vadd.f32 %v113, %v119
      %122 = vst [vmem:[#allocation3] sm:$0xff] %v121
    $region21: #{prediction_head_forward.1} parent=1 // pred_fallthru
      _
    // Predicated region
    $region22: #{prediction_head_forward.1} parent=1 // pred_check
      _
    $region23: #{prediction_head_forward.1} parent=1 // pred_check_branch
      %124 = sbr.rel (0) target = $region25
    $region24: #{prediction_head_forward.1} parent=1 // pred_region
      %s126 = ssub.s32 128, 128
      %127 = vsyncadd [#allocation4], %s126
      %s129 = sshll.u32 [#allocation3], 4
      %s130 = int_to_ptr.vmem [resolvable:$true] %s129
      %132 = dma.vmem_to_hbm [thread:$0]  %s130, 128, %s3, [#allocation4]
    $region25: #{prediction_head_forward.1} parent=1 // pred_fallthru
      _
    // Predicated region
    $region26: #{prediction_head_forward.1} parent=1 // pred_check
      _
    $region27: #{prediction_head_forward.1} parent=1 // pred_check_branch
      %134 = sbr.rel (0) target = $region29
    $region28: #{prediction_head_forward.1} parent=1 // pred_region
      %135 = dma.done [#allocation4], 128
    $region29: #{prediction_head_forward.1} parent=1 // pred_fallthru
      _
    %136 = vsyncpa [#allocation4], 1

</llo_original>
